<compile_context>
chip_gen: v6e
topology: v6e:2x2x1
jax: 0.10.0
libtpu: 0.0.40
codegen_flags: <defaults>
</compile_context>

<pallas_src>
import jax
import jax.numpy as jnp
from jax.experimental import pallas as pl
from jax.experimental.pallas import tpu as pltpu


def _round_up(x, m):
    return (x + m - 1) // m * m


# Batches at or below this run grid-less (single kernel invocation, everything
# in VMEM); larger batches use a batch grid with a "parallel" axis and
# VMEM-resident weights (constant index_map -> no per-tile weight re-fetch).
_SMALL_BATCH_MAX = 2048
_BATCH_TILE = 512
# Above this batch, stream the state in bf16 (only input that scales with B).
_STATE_BF16_MIN_BATCH = 16384
# Explicit VMEM budget: fits every generation (v7x default scoped = 32 MiB).
_VMEM_LIMIT_BYTES = 32 * 1024 * 1024


def actor_kernel(x_ref, w1_ref, b1_ref, w2_ref, b2_ref, w3_ref, b3_ref, o_ref):
    # bf16 operands on the MXU, f32 accumulation, f32 bias math.
    x = x_ref[...].astype(w1_ref.dtype)
    h1 = jnp.dot(x, w1_ref[...], preferred_element_type=jnp.float32) + b1_ref[...]
    # Cast to the weight dtype BEFORE the ReLU: max(x, 0) is exact in bf16, and
    # this halves the VPU elementwise width / vreg footprint of the big
    # (tm x 400) and (tm x 384) activations on bf16-native VALUs.
    h1 = jnp.maximum(h1.astype(w2_ref.dtype), 0)
    h2 = jnp.dot(h1, w2_ref[...], preferred_element_type=jnp.float32) + b2_ref[...]
    h2 = jnp.maximum(h2.astype(w3_ref.dtype), 0)
    h3 = jnp.dot(h2, w3_ref[...], preferred_element_type=jnp.float32) + b3_ref[...]
    o_ref[...] = jnp.tanh(h3)


def prepare_actor_params(w1, b1, w2, b2, w3, b3, weight_dtype=jnp.bfloat16):
    """One-time (outside the hot path) padding + cast of the Actor params.

    Weights are stored as (in_features, out_features).
      * H1 (w1's output / w2's contraction dim) is left UNPADDED: w2 is the
        dominant weight transfer and padding 400 -> 512 inflated it ~28%;
        Mosaic tail-masks the K=400 contraction.
      * H2 (w2's output / w3's contraction dim) is lane-padded to 128.
      * Weights go to `weight_dtype` (default bf16) to halve weight DMA;
        biases stay f32 (they feed the f32 accumulators).
    Zero padding is self-consistent: padded h2 columns are exactly 0 through
    the ReLU and padded w3 rows are 0, so valid outputs are exact.
    """
    S, H1 = w1.shape
    H2 = w2.shape[1]
    A = w3.shape[1]
    H2p = _round_up(H2, 128)

    w1p = w1.astype(weight_dtype)
    b1p = b1.reshape(1, H1).astype(jnp.float32)
    w2p = jnp.zeros((H1, H2p), weight_dtype).at[:, :H2].set(w2.astype(weight_dtype))
    b2p = jnp.zeros((1, H2p), jnp.float32).at[0, :H2].set(b2.astype(jnp.float32))
    w3p = jnp.zeros((H2p, A), weight_dtype).at[:H2, :].set(w3.astype(weight_dtype))
    b3p = b3.reshape(1, A).astype(jnp.float32)
    return w1p, b1p, w2p, b2p, w3p, b3p


@jax.jit
def actor_forward(state, w1p, b1p, w2p, b2p, w3p, b3p):
    """state: (B, S) f32 (unpadded).  Params from prepare_actor_params."""
    B, S = state.shape
    H1 = w1p.shape[1]
    H2p = w2p.shape[1]
    A = w3p.shape[1]
    out_shape = jax.ShapeDtypeStruct((B, A), jnp.float32)

    if B >= _STATE_BF16_MIN_BATCH:
        # State is the only input that scales with B; bf16 halves its HBM->VMEM
        # traffic for huge replay batches (matters most on v5e's ~0.82 TB/s
        # HBM).  The in-kernel astype then becomes a no-op; f32 accumulation
        # and biases are unchanged, so this is a DMA change, not a compute one.
        state = state.astype(jnp.bfloat16)

    params = (w1p, b1p, w2p, b2p, w3p, b3p)
    param_bytes = sum(int(p.size) * p.dtype.itemsize for p in params)
    cost = pl.CostEstimate(
        flops=2 * B * (S * H1 + H1 * H2p + H2p * A),
        transcendentals=B * A,
        bytes_accessed=param_bytes
        + int(state.size) * state.dtype.itemsize
        + B * A * 4,
    )

    if B <= _SMALL_BATCH_MAX:
        # Inference / typical-training batches: single grid-less invocation,
        # everything resident in VMEM, zero per-grid-step overhead.
        return pl.pallas_call(
            actor_kernel,
            out_shape=out_shape,
            in_specs=[pl.BlockSpec(memory_space=pltpu.VMEM)] * 7,
            out_specs=pl.BlockSpec(memory_space=pltpu.VMEM),
            compiler_params=pltpu.CompilerParams(
                vmem_limit_bytes=_VMEM_LIMIT_BYTES),
            cost_estimate=cost,
        )(state, *params)

    # Very large batches: tile the batch ("parallel" -> sharded across the two
    # TensorCores on v7x; no-op on single-TC v5e/v6e).  Weights/biases use
    # constant index_maps so they stay resident in VMEM across batch tiles.
    # The tile is kept large (512) so each core amortizes its own weight DMA
    # over many rows and per-step overhead stays negligible.
    tm = _BATCH_TILE
    grid_spec = pltpu.PrefetchScalarGridSpec(
        num_scalar_prefetch=0,
        grid=(pl.cdiv(B, tm),),
        in_specs=[
            pl.BlockSpec((tm, S), lambda i: (i, 0)),
            pl.BlockSpec(w1p.shape, lambda i: (0, 0)),
            pl.BlockSpec(b1p.shape, lambda i: (0, 0)),
            pl.BlockSpec(w2p.shape, lambda i: (0, 0)),
            pl.BlockSpec(b2p.shape, lambda i: (0, 0)),
            pl.BlockSpec(w3p.shape, lambda i: (0, 0)),
            pl.BlockSpec(b3p.shape, lambda i: (0, 0)),
        ],
        out_specs=pl.BlockSpec((tm, A), lambda i: (i, 0)),
    )
    return pl.pallas_call(
        actor_kernel,
        out_shape=out_shape,
        grid_spec=grid_spec,
        compiler_params=pltpu.CompilerParams(
            dimension_semantics=("parallel",),
            vmem_limit_bytes=_VMEM_LIMIT_BYTES,
        ),
        cost_estimate=cost,
    )(state, *params)


def init_actor_params(key, state_size, action_size, fc1_units=400, fc2_units=300):
    """Deterministic init mirroring the PyTorch Actor:
       - fc1/fc2 weights ~ U(-1/sqrt(fan_in), 1/sqrt(fan_in))  (hidden_init)
       - fc3 weights     ~ U(-3e-3, 3e-3)
       - biases keep PyTorch Linear default U(-1/sqrt(fan_in), 1/sqrt(fan_in))
       Weights stored as (in_features, out_features), f32."""
    ks = jax.random.split(key, 6)

    lim1 = 1.0 / jnp.sqrt(jnp.float32(state_size))
    w1 = jax.random.uniform(ks[0], (state_size, fc1_units), jnp.float32, -lim1, lim1)
    b1 = jax.random.uniform(ks[1], (fc1_units,), jnp.float32, -lim1, lim1)

    lim2 = 1.0 / jnp.sqrt(jnp.float32(fc1_units))
    w2 = jax.random.uniform(ks[2], (fc1_units, fc2_units), jnp.float32, -lim2, lim2)
    b2 = jax.random.uniform(ks[3], (fc2_units,), jnp.float32, -lim2, lim2)

    lim3 = 1.0 / jnp.sqrt(jnp.float32(fc2_units))
    w3 = jax.random.uniform(ks[4], (fc2_units, action_size), jnp.float32, -3e-3, 3e-3)
    b3 = jax.random.uniform(ks[5], (action_size,), jnp.float32, -lim3, lim3)

    return w1, b1, w2, b2, w3, b3


def actor_reference(state, w1, b1, w2, b2, w3, b3):
    h1 = jax.nn.relu(state @ w1 + b1)
    h2 = jax.nn.relu(h1 @ w2 + b2)
    return jnp.tanh(h2 @ w3 + b3)


if __name__ == "__main__":
    key = jax.random.PRNGKey(0)
    k_param, k_state, k_big = jax.random.split(key, 3)

    batch = 2
    state_size = 32
    action_size = 4

    raw_params = init_actor_params(k_param, state_size, action_size)
    # One-time param preparation (padding + bf16 cast) outside the hot path.
    params = prepare_actor_params(*raw_params)
    params = tuple(jax.block_until_ready(p) for p in params)

    # Small (inference-style) batch -> grid-less path.
    state = jax.random.normal(k_state, (batch, state_size), jnp.float32)
    out = jax.block_until_ready(actor_forward(state, *params))
    ref = actor_reference(state, *raw_params)
    assert out.shape == (batch, action_size), out.shape
    # bf16 weights -> relaxed tolerance against the f32 reference.
    assert jnp.allclose(out, ref, atol=2e-2, rtol=0.0), (
        f"small-batch max abs diff {jnp.max(jnp.abs(out - ref))}"
    )

    # Large batch -> batch-tiled grid path (parallel axis, resident weights).
    big_batch = 2560  # > _SMALL_BATCH_MAX: 5 tiles of 512
    state_big = jax.random.normal(k_big, (big_batch, state_size), jnp.float32)
    out_big = jax.block_until_ready(actor_forward(state_big, *params))
    ref_big = actor_reference(state_big, *raw_params)
    assert out_big.shape == (big_batch, action_size), out_big.shape
    assert jnp.allclose(out_big, ref_big, atol=2e-2, rtol=0.0), (
        f"big-batch max abs diff {jnp.max(jnp.abs(out_big - ref_big))}"
    )

    print("KERNEL_OK")
</pallas_src>

<mosaic_0001>
module attributes {stable_mosaic.version = 11 : i64} {
  func.func @actor_kernel(%arg0: memref<2x32xf32, #tpu.memory_space<vmem>>, %arg1: memref<32x400xbf16, #tpu.memory_space<vmem>>, %arg2: memref<1x400xf32, #tpu.memory_space<vmem>>, %arg3: memref<400x384xbf16, #tpu.memory_space<vmem>>, %arg4: memref<1x384xf32, #tpu.memory_space<vmem>>, %arg5: memref<384x4xbf16, #tpu.memory_space<vmem>>, %arg6: memref<1x4xf32, #tpu.memory_space<vmem>>, %arg7: memref<2x4xf32, #tpu.memory_space<vmem>>) attributes {dimension_semantics = [], scalar_prefetch = 0 : i64, scratch_operands = 0 : i64, tpu.core_type = #tpu.core_type<tc>} {
    %c0 = arith.constant 0 : index
    %c0_0 = arith.constant 0 : index
    %0 = vector.load %arg0[%c0, %c0_0] : memref<2x32xf32, #tpu.memory_space<vmem>>, vector<2x32xf32>
    %1 = arith.truncf %0 : vector<2x32xf32> to vector<2x32xbf16>
    %c0_1 = arith.constant 0 : index
    %c0_2 = arith.constant 0 : index
    %2 = vector.load %arg1[%c0_1, %c0_2] : memref<32x400xbf16, #tpu.memory_space<vmem>>, vector<32x400xbf16>
    %cst = arith.constant dense<0.000000e+00> : vector<2x400xf32>
    %3 = tpu.matmul %1, %2, %cst {dimension_numbers = #tpu.dot_dimension_numbers<[1], [0], [0], [1], [0, 0, 1, 1], [], []>} : vector<2x32xbf16>, vector<32x400xbf16>, vector<2x400xf32> -> vector<2x400xf32>
    %c0_3 = arith.constant 0 : index
    %c0_4 = arith.constant 0 : index
    %4 = vector.load %arg2[%c0_3, %c0_4] : memref<1x400xf32, #tpu.memory_space<vmem>>, vector<1x400xf32>
    %5 = vector.broadcast %4 : vector<1x400xf32> to vector<2x400xf32>
    %6 = arith.addf %3, %5 : vector<2x400xf32>
    %7 = arith.truncf %6 : vector<2x400xf32> to vector<2x400xbf16>
    %cst_5 = arith.constant 0.000000e+00 : bf16
    %8 = vector.broadcast %cst_5 : bf16 to vector<2x400xbf16>
    %9 = arith.maximumf %7, %8 : vector<2x400xbf16>
    %c0_6 = arith.constant 0 : index
    %c0_7 = arith.constant 0 : index
    %10 = vector.load %arg3[%c0_6, %c0_7] : memref<400x384xbf16, #tpu.memory_space<vmem>>, vector<400x384xbf16>
    %cst_8 = arith.constant dense<0.000000e+00> : vector<2x384xf32>
    %11 = tpu.matmul %9, %10, %cst_8 {dimension_numbers = #tpu.dot_dimension_numbers<[1], [0], [0], [1], [0, 0, 1, 1], [], []>} : vector<2x400xbf16>, vector<400x384xbf16>, vector<2x384xf32> -> vector<2x384xf32>
    %c0_9 = arith.constant 0 : index
    %c0_10 = arith.constant 0 : index
    %12 = vector.load %arg4[%c0_9, %c0_10] : memref<1x384xf32, #tpu.memory_space<vmem>>, vector<1x384xf32>
    %13 = vector.broadcast %12 : vector<1x384xf32> to vector<2x384xf32>
    %14 = arith.addf %11, %13 : vector<2x384xf32>
    %15 = arith.truncf %14 : vector<2x384xf32> to vector<2x384xbf16>
    %cst_11 = arith.constant 0.000000e+00 : bf16
    %16 = vector.broadcast %cst_11 : bf16 to vector<2x384xbf16>
    %17 = arith.maximumf %15, %16 : vector<2x384xbf16>
    %c0_12 = arith.constant 0 : index
    %c0_13 = arith.constant 0 : index
    %18 = vector.load %arg5[%c0_12, %c0_13] : memref<384x4xbf16, #tpu.memory_space<vmem>>, vector<384x4xbf16>
    %cst_14 = arith.constant dense<0.000000e+00> : vector<2x4xf32>
    %19 = tpu.matmul %17, %18, %cst_14 {dimension_numbers = #tpu.dot_dimension_numbers<[1], [0], [0], [1], [0, 0, 1, 1], [], []>} : vector<2x384xbf16>, vector<384x4xbf16>, vector<2x4xf32> -> vector<2x4xf32>
    %c0_15 = arith.constant 0 : index
    %c0_16 = arith.constant 0 : index
    %20 = vector.load %arg6[%c0_15, %c0_16] : memref<1x4xf32, #tpu.memory_space<vmem>>, vector<1x4xf32>
    %21 = vector.broadcast %20 : vector<1x4xf32> to vector<2x4xf32>
    %22 = arith.addf %19, %21 : vector<2x4xf32>
    %23 = math.tanh %22 : vector<2x4xf32>
    %c0_17 = arith.constant 0 : index
    %c0_18 = arith.constant 0 : index
    %24 = vector.load %arg7[%c0_17, %c0_18] : memref<2x4xf32, #tpu.memory_space<vmem>>, vector<2x4xf32>
    tpu.vector_store %arg7[%c0_17, %c0_18], %23 {strides = array<i32>} : memref<2x4xf32, #tpu.memory_space<vmem>>, vector<2x4xf32>,
    return
  }
}

</mosaic_0001>

<llo_original>
// kernel: actor_forward.1
$region0: #{actor_forward.1}
  #allocation0 [shape = 'u32[]', space=smem, size = 0x4, offset = 0x4, fixed_abs, tag = 'smem constant byte address 0x4 - core index']
  #allocation1 [shape = 'u32[144,128]{1,0:T(1,128)}', space=vmem, size = 0x12000, scoped, tag = 'internal scratch']
  %s0 = inlined_call_operand.vmem [shape: f32[2,32], index: 0, kind: input, shape index: {}]
  %s1 = inlined_call_operand.vmem [shape: bf16[32,400], index: 1, kind: input, shape index: {}]
  %s2 = inlined_call_operand.vmem [shape: f32[1,400], index: 2, kind: input, shape index: {}]
  %s3 = inlined_call_operand.hbm [shape: bf16[400,384], index: 3, kind: input, shape index: {}]
  %s4 = inlined_call_operand.vmem [shape: f32[1,384], index: 4, kind: input, shape index: {}]
  %s5 = inlined_call_operand.vmem [shape: bf16[384,4], index: 5, kind: input, shape index: {}]
  %s6 = inlined_call_operand.vmem [shape: f32[1,4], index: 6, kind: input, shape index: {}]
  %s7 = inlined_call_operand.hbm [shape: f32[2,4], index: 7, kind: output, shape index: {}]
  %s8 = sld [smem:[#allocation0]]
  $region42: #{actor_forward.1} parent=0
    _
  %s10 = ssub.s32 1, %s8
  %s11 = scalar_select 0, %s10, %s8
  $region1: #{actor_forward.1} parent=0
    #allocation2 [shape = 'u8[307200]{0}', space=vmem, size = 0x4b000, scoped, tag = 'input window, operand 3, single buffered']
    #allocation3 [shape = 's32[1]{0}', space=sflag, size = 0x4, scoped, tag = 'scoped memory for actor_forward.1']
    #allocation4 [shape = 's32[1]{0}', space=sflag, size = 0x4, scoped, tag = 'scoped memory for actor_forward.1']
    #allocation5 [shape = 'u8[1024]{0}', space=vmem, size = 0x400, scoped, tag = 'output window, operand 0, single buffered']
    %12 = vsyncpa [#allocation3], 0
    %13 = vsyncpa [#allocation4], 0
    // Predicated region
    $region2: #{actor_forward.1} parent=1 // pred_check
      _
    $region3: #{actor_forward.1} parent=1 // pred_check_branch
      %15 = sbr.rel (0) target = $region5
    $region4: #{actor_forward.1} parent=1 // pred_region
      _
    $region5: #{actor_forward.1} parent=1 // pred_fallthru
      _
    // Predicated region
    $region6: #{actor_forward.1} parent=1 // pred_check
      _
    $region7: #{actor_forward.1} parent=1 // pred_check_branch
      %17 = sbr.rel (0) target = $region9
    $region8: #{actor_forward.1} parent=1 // pred_region
      _
    $region9: #{actor_forward.1} parent=1 // pred_fallthru
      _
    // Predicated region
    $region10: #{actor_forward.1} parent=1 // pred_check
      _
    $region11: #{actor_forward.1} parent=1 // pred_check_branch
      %19 = sbr.rel (0) target = $region13
    $region12: #{actor_forward.1} parent=1 // pred_region
      _
    $region13: #{actor_forward.1} parent=1 // pred_fallthru
      _
    // Predicated region
    $region14: #{actor_forward.1} parent=1 // pred_check
      _
    $region15: #{actor_forward.1} parent=1 // pred_check_branch
      %21 = sbr.rel (0) target = $region17
    $region16: #{actor_forward.1} parent=1 // pred_region
      %s23 = ssub.s32 9600, 9600
      %24 = vsyncadd [#allocation3], %s23
      %s25 = sshll.u32 [#allocation2], 4
      %s26 = int_to_ptr.vmem [resolvable:$true] %s25
      %31 = dma.hbm_to_vmem [thread:$0]  %s3, 9600, %s26, [#allocation3], 192, 192, 12
    $region17: #{actor_forward.1} parent=1 // pred_fallthru
      _
    // Predicated region
    $region18: #{actor_forward.1} parent=1 // pred_check
      _
    $region19: #{actor_forward.1} parent=1 // pred_check_branch
      %33 = sbr.rel (0) target = $region21
    $region20: #{actor_forward.1} parent=1 // pred_region
      _
    $region21: #{actor_forward.1} parent=1 // pred_fallthru
      _
    // Predicated region
    $region22: #{actor_forward.1} parent=1 // pred_check
      _
    $region23: #{actor_forward.1} parent=1 // pred_check_branch
      %35 = sbr.rel (0) target = $region25
    $region24: #{actor_forward.1} parent=1 // pred_region
      _
    $region25: #{actor_forward.1} parent=1 // pred_fallthru
      _
    // Predicated region
    $region26: #{actor_forward.1} parent=1 // pred_check
      _
    $region27: #{actor_forward.1} parent=1 // pred_check_branch
      %37 = sbr.rel (0) target = $region29
    $region28: #{actor_forward.1} parent=1 // pred_region
      _
    $region29: #{actor_forward.1} parent=1 // pred_fallthru
      _
    // Predicated region
    $region30: #{actor_forward.1} parent=1 // pred_check
      _
    $region31: #{actor_forward.1} parent=1 // pred_check_branch
      %39 = sbr.rel (0) target = $region33
    $region32: #{actor_forward.1} parent=1 // pred_region
      %40 = dma.done [#allocation3], 9600
    $region33: #{actor_forward.1} parent=1 // pred_fallthru
      _
    %v42 = vld [vmem:[%s0] sm:$0x3]
    %v43 = vpack.c.bf16 %v42, %v42
    %v44 = vld [vmem:[%s1] sm:$0xff]
    %v45 = vld [vmem:[%s1 + $0x8] sm:$0xff]
    %v46 = vld [vmem:[%s1 + $0x10] sm:$0xff]
    %v47 = vld [vmem:[%s1 + $0x18] sm:$0xff]
    %v48 = vld [vmem:[%s1 + $0x20] sm:$0xff]
    %v49 = vld [vmem:[%s1 + $0x28] sm:$0xff]
    %v50 = vld [vmem:[%s1 + $0x30] sm:$0xff]
    %v51 = vld [vmem:[%s1 + $0x38] sm:$0xff]
    %v52 = vld [vmem:[%s2] sm:$0xf]
    %v54 = vlaneseq
    %v55 = vshrl.u32 %v54, 7
    %v56 = vsub.s32 0, %v55
    %v57 = vrot.slane %v52, %v56
    %v58 = vlaneseq
    %v59 = vshrl.u32 %v58, 7
    %v60 = vsub.s32 1, %v59
    %v61 = vrot.slane %v52, %v60
    %v62 = vlaneseq
    %v63 = vshrl.u32 %v62, 7
    %v64 = vsub.s32 2, %v63
    %v65 = vrot.slane %v52, %v64
    %v66 = vlaneseq
    %v67 = vshrl.u32 %v66, 7
    %v68 = vsub.s32 3, %v67
    %v69 = vrot.slane %v52, %v68
    %v82 = vunpack.c.l.b16 %v44
    %v83 = vunpack.c.h.b16 %v44
    %v84 = vunpack.c.l.b16 %v45
    %v85 = vunpack.c.h.b16 %v45
    %v86 = vunpack.c.l.b16 %v46
    %v87 = vunpack.c.h.b16 %v46
    %v88 = vunpack.c.l.b16 %v47
    %v89 = vunpack.c.h.b16 %v47
    %v90 = vunpack.c.l.b16 %v48
    %v91 = vunpack.c.h.b16 %v48
    %v92 = vunpack.c.l.b16 %v49
    %v93 = vunpack.c.h.b16 %v49
    %v94 = vunpack.c.l.b16 %v50
    %v95 = vunpack.c.h.b16 %v50
    %v96 = vunpack.c.l.b16 %v51
    %v97 = vunpack.c.h.b16 %v51
    %v98 = vpack.c.b16 %v86, %v82
    %v99 = vpack.c.b16 %v87, %v83
    %v100 = vpack.c.b16 %v88, %v84
    %v101 = vpack.c.b16 %v89, %v85
    %v102 = vpack.c.b16 %v94, %v90
    %v103 = vpack.c.b16 %v95, %v91
    %v104 = vpack.c.b16 %v96, %v92
    %v105 = vpack.c.b16 %v97, %v93
    %vm114 = vcmask 261120
    %v116 = vsel %vm114, %v43, 0
    %118 = vmatprep.subr.bf16.mxu0 0
    %119 = vmatpush1.bf16.msra.mxu0 0
    %120 = vmatprep.subr.bf16.mxu0 0
    %121 = vmatpush1.bf16.msra.mxu0 0
    %122 = vmatprep.subr.bf16.mxu0 0
    %123 = vmatpush1.bf16.msra.mxu0 0
    %124 = vmatprep.subr.bf16.mxu0 0
    %125 = vmatpush1.bf16.msra.mxu0 0
    %126 = vmatprep.subr.bf16.mxu0 0
    %127 = vmatpush1.bf16.msra.mxu0 0
    %128 = vmatprep.subr.bf16.mxu0 0
    %129 = vmatpush1.bf16.msra.mxu0 0
    %130 = vmatprep.subr.bf16.mxu0 %v103
    %131 = vmatpush1.bf16.msra.mxu0 %v102
    %132 = vmatprep.subr.bf16.mxu0 %v99
    %133 = vmatpush1.bf16.msra.mxu0 %v98
    %134 = vmatprep.subr.bf16.mxu0 0
    %135 = vmatpush2.bf16.msra.mxu0 0
    %136 = vmatprep.subr.bf16.mxu0 0
    %137 = vmatpush2.bf16.msra.mxu0 0
    %138 = vmatprep.subr.bf16.mxu0 0
    %139 = vmatpush2.bf16.msra.mxu0 0
    %140 = vmatprep.subr.bf16.mxu0 0
    %141 = vmatpush2.bf16.msra.mxu0 0
    %142 = vmatprep.subr.bf16.mxu0 0
    %143 = vmatpush2.bf16.msra.mxu0 0
    %144 = vmatprep.subr.bf16.mxu0 0
    %145 = vmatpush2.bf16.msra.mxu0 0
    %146 = vmatprep.subr.bf16.mxu0 0
    %147 = vmatpush2.bf16.msra.mxu0 0
    %148 = vmatprep.subr.bf16.mxu0 0
    %149 = vmatpush2.bf16.msra.mxu0 0
    %150 = vmatprep.mubr.bf16.mxu0 0
    %151 = vmatmul.mubr.bf16.gmra.mxu0 %v116
    %v152 = vpop.f32.mrf.mxu0
    %v153 = vadd.f32 %v57, %v152
    %v154 = vpop.f32.mrf.mxu0
    %v155 = vadd.f32 %v61, %v154
    %v156 = vpop.f32.mrf.mxu0
    %v157 = vpop.f32.mrf.mxu0
    %158 = vdwg.mxu0
    %159 = vmatprep.subr.bf16.mxu0 0
    %160 = vmatpush1.bf16.msra.mxu0 0
    %161 = vmatprep.subr.bf16.mxu0 0
    %162 = vmatpush1.bf16.msra.mxu0 0
    %163 = vmatprep.subr.bf16.mxu0 0
    %164 = vmatpush1.bf16.msra.mxu0 0
    %165 = vmatprep.subr.bf16.mxu0 0
    %166 = vmatpush1.bf16.msra.mxu0 0
    %167 = vmatprep.subr.bf16.mxu0 0
    %168 = vmatpush1.bf16.msra.mxu0 0
    %169 = vmatprep.subr.bf16.mxu0 0
    %170 = vmatpush1.bf16.msra.mxu0 0
    %171 = vmatprep.subr.bf16.mxu0 %v105
    %172 = vmatpush1.bf16.msra.mxu0 %v104
    %173 = vmatprep.subr.bf16.mxu0 %v101
    %174 = vmatpush1.bf16.msra.mxu0 %v100
    %175 = vmatprep.subr.bf16.mxu0 0
    %176 = vmatpush2.bf16.msra.mxu0 0
    %177 = vmatprep.subr.bf16.mxu0 0
    %178 = vmatpush2.bf16.msra.mxu0 0
    %179 = vmatprep.subr.bf16.mxu0 0
    %180 = vmatpush2.bf16.msra.mxu0 0
    %181 = vmatprep.subr.bf16.mxu0 0
    %182 = vmatpush2.bf16.msra.mxu0 0
    %183 = vmatprep.subr.bf16.mxu0 0
    %184 = vmatpush2.bf16.msra.mxu0 0
    %185 = vmatprep.subr.bf16.mxu0 0
    %186 = vmatpush2.bf16.msra.mxu0 0
    %187 = vmatprep.subr.bf16.mxu0 0
    %188 = vmatpush2.bf16.msra.mxu0 0
    %189 = vmatprep.subr.bf16.mxu0 0
    %190 = vmatpush2.bf16.msra.mxu0 0
    %191 = vmatprep.mubr.bf16.mxu0 0
    %192 = vmatmul.mubr.bf16.gmra.mxu0 %v116
    %v193 = vpop.f32.mrf.mxu0
    %v194 = vadd.f32 %v65, %v193
    %v195 = vpop.f32.mrf.mxu0
    %v196 = vadd.f32 %v69, %v195
    %v197 = vpop.f32.mrf.mxu0
    %v198 = vpop.f32.mrf.mxu0
    %199 = vdwg.mxu0
    %v200 = vpack.c.bf16 %v153, %v153
    %v201 = vpack.c.bf16 %v155, %v155
    %v202 = vpack.c.bf16 %v194, %v194
    %v203 = vpack.c.bf16 %v196, %v196
    %v204 = vmax.bf16 %v200, 0
    %v205 = vmax.bf16 %v201, 0
    %v206 = vmax.bf16 %v202, 0
    %v207 = vmax.bf16 %v203, 0
    %v208 = vld [vmem:[#allocation2] sm:$0xff]
    %v209 = vld [vmem:[#allocation2 + $0x8] sm:$0xf]
    %v210 = vld [vmem:[#allocation2 + $0xc] sm:$0xff]
    %v211 = vld [vmem:[#allocation2 + $0x14] sm:$0xf]
    %v212 = vld [vmem:[#allocation2 + $0x18] sm:$0xff]
    %v213 = vld [vmem:[#allocation2 + $0x20] sm:$0xf]
    %v214 = vld [vmem:[#allocation2 + $0x24] sm:$0xff]
    %v215 = vld [vmem:[#allocation2 + $0x2c] sm:$0xf]
    %v216 = vld [vmem:[#allocation2 + $0x30] sm:$0xff]
    %v217 = vld [vmem:[#allocation2 + $0x38] sm:$0xf]
    %v218 = vld [vmem:[#allocation2 + $0x3c] sm:$0xff]
    %v219 = vld [vmem:[#allocation2 + $0x44] sm:$0xf]
    %v220 = vld [vmem:[#allocation2 + $0x48] sm:$0xff]
    %v221 = vld [vmem:[#allocation2 + $0x50] sm:$0xf]
    %v222 = vld [vmem:[#allocation2 + $0x54] sm:$0xff]
    %v223 = vld [vmem:[#allocation2 + $0x5c] sm:$0xf]
    %v224 = vld [vmem:[#allocation2 + $0x60] sm:$0xff]
    %v225 = vld [vmem:[#allocation2 + $0x68] sm:$0xf]
    %v226 = vld [vmem:[#allocation2 + $0x6c] sm:$0xff]
    %v227 = vld [vmem:[#allocation2 + $0x74] sm:$0xf]
    %v228 = vld [vmem:[#allocation2 + $0x78] sm:$0xff]
    %v229 = vld [vmem:[#allocation2 + $0x80] sm:$0xf]
    %v230 = vld [vmem:[#allocation2 + $0x84] sm:$0xff]
    %v231 = vld [vmem:[#allocation2 + $0x8c] sm:$0xf]
    %v232 = vld [vmem:[#allocation2 + $0x90] sm:$0xff]
    %v233 = vld [vmem:[#allocation2 + $0x98] sm:$0xf]
    %v234 = vld [vmem:[#allocation2 + $0x9c] sm:$0xff]
    %v235 = vld [vmem:[#allocation2 + $0xa4] sm:$0xf]
    %v236 = vld [vmem:[#allocation2 + $0xa8] sm:$0xff]
    %v237 = vld [vmem:[#allocation2 + $0xb0] sm:$0xf]
    %v238 = vld [vmem:[#allocation2 + $0xb4] sm:$0xff]
    %v239 = vld [vmem:[#allocation2 + $0xbc] sm:$0xf]
    %v240 = vld [vmem:[#allocation2 + $0xc0] sm:$0xff]
    %v241 = vld [vmem:[#allocation2 + $0xc8] sm:$0xf]
    %v242 = vld [vmem:[#allocation2 + $0xcc] sm:$0xff]
    %v243 = vld [vmem:[#allocation2 + $0xd4] sm:$0xf]
    %v244 = vld [vmem:[#allocation2 + $0xd8] sm:$0xff]
    %v245 = vld [vmem:[#allocation2 + $0xe0] sm:$0xf]
    %v246 = vld [vmem:[#allocation2 + $0xe4] sm:$0xff]
    %v247 = vld [vmem:[#allocation2 + $0xec] sm:$0xf]
    %v248 = vld [vmem:[#allocation2 + $0xf0] sm:$0xff]
    %v249 = vld [vmem:[#allocation2 + $0xf8] sm:$0xf]
    %v250 = vld [vmem:[#allocation2 + $0xfc] sm:$0xff]
    %v251 = vld [vmem:[#allocation2 + $0x104] sm:$0xf]
    %v252 = vld [vmem:[#allocation2 + $0x108] sm:$0xff]
    %v253 = vld [vmem:[#allocation2 + $0x110] sm:$0xf]
    %v254 = vld [vmem:[#allocation2 + $0x114] sm:$0xff]
    %v255 = vld [vmem:[#allocation2 + $0x11c] sm:$0xf]
    %v256 = vld [vmem:[#allocation2 + $0x120] sm:$0xff]
    %v257 = vld [vmem:[#allocation2 + $0x128] sm:$0xf]
    %v258 = vld [vmem:[#allocation2 + $0x12c] sm:$0xff]
    %v259 = vld [vmem:[#allocation2 + $0x134] sm:$0xf]
    %v260 = vld [vmem:[#allocation2 + $0x138] sm:$0xff]
    %v261 = vld [vmem:[#allocation2 + $0x140] sm:$0xf]
    %v262 = vld [vmem:[#allocation2 + $0x144] sm:$0xff]
    %v263 = vld [vmem:[#allocation2 + $0x14c] sm:$0xf]
    %v264 = vld [vmem:[#allocation2 + $0x150] sm:$0xff]
    %v265 = vld [vmem:[#allocation2 + $0x158] sm:$0xf]
    %v266 = vld [vmem:[#allocation2 + $0x15c] sm:$0xff]
    %v267 = vld [vmem:[#allocation2 + $0x164] sm:$0xf]
    %v268 = vld [vmem:[#allocation2 + $0x168] sm:$0xff]
    %v269 = vld [vmem:[#allocation2 + $0x170] sm:$0xf]
    %v270 = vld [vmem:[#allocation2 + $0x174] sm:$0xff]
    %v271 = vld [vmem:[#allocation2 + $0x17c] sm:$0xf]
    %v272 = vld [vmem:[#allocation2 + $0x180] sm:$0xff]
    %v273 = vld [vmem:[#allocation2 + $0x188] sm:$0xf]
    %v274 = vld [vmem:[#allocation2 + $0x18c] sm:$0xff]
    %v275 = vld [vmem:[#allocation2 + $0x194] sm:$0xf]
    %v276 = vld [vmem:[#allocation2 + $0x198] sm:$0xff]
    %v277 = vld [vmem:[#allocation2 + $0x1a0] sm:$0xf]
    %v278 = vld [vmem:[#allocation2 + $0x1a4] sm:$0xff]
    %v279 = vld [vmem:[#allocation2 + $0x1ac] sm:$0xf]
    %v280 = vld [vmem:[#allocation2 + $0x1b0] sm:$0xff]
    %v281 = vld [vmem:[#allocation2 + $0x1b8] sm:$0xf]
    %v282 = vld [vmem:[#allocation2 + $0x1bc] sm:$0xff]
    %v283 = vld [vmem:[#allocation2 + $0x1c4] sm:$0xf]
    %v284 = vld [vmem:[#allocation2 + $0x1c8] sm:$0xff]
    %v285 = vld [vmem:[#allocation2 + $0x1d0] sm:$0xf]
    %v286 = vld [vmem:[#allocation2 + $0x1d4] sm:$0xff]
    %v287 = vld [vmem:[#allocation2 + $0x1dc] sm:$0xf]
    %v288 = vld [vmem:[#allocation2 + $0x1e0] sm:$0xff]
    %v289 = vld [vmem:[#allocation2 + $0x1e8] sm:$0xf]
    %v290 = vld [vmem:[#allocation2 + $0x1ec] sm:$0xff]
    %v291 = vld [vmem:[#allocation2 + $0x1f4] sm:$0xf]
    %v292 = vld [vmem:[#allocation2 + $0x1f8] sm:$0xff]
    %v293 = vld [vmem:[#allocation2 + $0x200] sm:$0xf]
    %v294 = vld [vmem:[#allocation2 + $0x204] sm:$0xff]
    %v295 = vld [vmem:[#allocation2 + $0x20c] sm:$0xf]
    %v296 = vld [vmem:[#allocation2 + $0x210] sm:$0xff]
    %v297 = vld [vmem:[#allocation2 + $0x218] sm:$0xf]
    %v298 = vld [vmem:[#allocation2 + $0x21c] sm:$0xff]
    %v299 = vld [vmem:[#allocation2 + $0x224] sm:$0xf]
    %v300 = vld [vmem:[#allocation2 + $0x228] sm:$0xff]
    %v301 = vld [vmem:[#allocation2 + $0x230] sm:$0xf]
    %v302 = vld [vmem:[#allocation2 + $0x234] sm:$0xff]
    %v303 = vld [vmem:[#allocation2 + $0x23c] sm:$0xf]
    %v304 = vld [vmem:[#allocation2 + $0x240] sm:$0xff]
    %v305 = vld [vmem:[#allocation2 + $0x248] sm:$0xf]
    %v306 = vld [vmem:[#allocation2 + $0x24c] sm:$0xff]
    %v307 = vld [vmem:[#allocation2 + $0x254] sm:$0xf]
    %v308 = vld [vmem:[%s4] sm:$0x7]
    %v310 = vlaneseq
    %v311 = vshrl.u32 %v310, 7
    %v312 = vsub.s32 0, %v311
    %v313 = vrot.slane %v308, %v312
    %v314 = vlaneseq
    %v315 = vshrl.u32 %v314, 7
    %v316 = vsub.s32 1, %v315
    %v317 = vrot.slane %v308, %v316
    %v318 = vlaneseq
    %v319 = vshrl.u32 %v318, 7
    %v320 = vsub.s32 2, %v319
    %v321 = vrot.slane %v308, %v320
    %v425 = vunpack.c.l.b16 %v208
    %v426 = vunpack.c.h.b16 %v208
    %v427 = vunpack.c.l.b16 %v209
    %v428 = vunpack.c.l.b16 %v210
    %v429 = vunpack.c.h.b16 %v210
    %v430 = vunpack.c.l.b16 %v211
    %v431 = vunpack.c.l.b16 %v212
    %v432 = vunpack.c.h.b16 %v212
    %v433 = vunpack.c.l.b16 %v213
    %v434 = vunpack.c.l.b16 %v214
    %v435 = vunpack.c.h.b16 %v214
    %v436 = vunpack.c.l.b16 %v215
    %v437 = vunpack.c.l.b16 %v216
    %v438 = vunpack.c.h.b16 %v216
    %v439 = vunpack.c.l.b16 %v217
    %v440 = vunpack.c.l.b16 %v218
    %v441 = vunpack.c.h.b16 %v218
    %v442 = vunpack.c.l.b16 %v219
    %v443 = vunpack.c.l.b16 %v220
    %v444 = vunpack.c.h.b16 %v220
    %v445 = vunpack.c.l.b16 %v221
    %v446 = vunpack.c.l.b16 %v222
    %v447 = vunpack.c.h.b16 %v222
    %v448 = vunpack.c.l.b16 %v223
    %v449 = vunpack.c.l.b16 %v224
    %v450 = vunpack.c.h.b16 %v224
    %v451 = vunpack.c.l.b16 %v225
    %v452 = vunpack.c.l.b16 %v226
    %v453 = vunpack.c.h.b16 %v226
    %v454 = vunpack.c.l.b16 %v227
    %v455 = vunpack.c.l.b16 %v228
    %v456 = vunpack.c.h.b16 %v228
    %v457 = vunpack.c.l.b16 %v229
    %v458 = vunpack.c.l.b16 %v230
    %v459 = vunpack.c.h.b16 %v230
    %v460 = vunpack.c.l.b16 %v231
    %v461 = vunpack.c.l.b16 %v232
    %v462 = vunpack.c.h.b16 %v232
    %v463 = vunpack.c.l.b16 %v233
    %v464 = vunpack.c.l.b16 %v234
    %v465 = vunpack.c.h.b16 %v234
    %v466 = vunpack.c.l.b16 %v235
    %v467 = vunpack.c.l.b16 %v236
    %v468 = vunpack.c.h.b16 %v236
    %v469 = vunpack.c.l.b16 %v237
    %v470 = vunpack.c.l.b16 %v238
    %v471 = vunpack.c.h.b16 %v238
    %v472 = vunpack.c.l.b16 %v239
    %v473 = vunpack.c.l.b16 %v240
    %v474 = vunpack.c.h.b16 %v240
    %v475 = vunpack.c.l.b16 %v241
    %v476 = vunpack.c.l.b16 %v242
    %v477 = vunpack.c.h.b16 %v242
    %v478 = vunpack.c.l.b16 %v243
    %v479 = vunpack.c.l.b16 %v244
    %v480 = vunpack.c.h.b16 %v244
    %v481 = vunpack.c.l.b16 %v245
    %v482 = vunpack.c.l.b16 %v246
    %v483 = vunpack.c.h.b16 %v246
    %v484 = vunpack.c.l.b16 %v247
    %v485 = vunpack.c.l.b16 %v248
    %v486 = vunpack.c.h.b16 %v248
    %v487 = vunpack.c.l.b16 %v249
    %v488 = vunpack.c.l.b16 %v250
    %v489 = vunpack.c.h.b16 %v250
    %v490 = vunpack.c.l.b16 %v251
    %v491 = vunpack.c.l.b16 %v252
    %v492 = vunpack.c.h.b16 %v252
    %v493 = vunpack.c.l.b16 %v253
    %v494 = vunpack.c.l.b16 %v254
    %v495 = vunpack.c.h.b16 %v254
    %v496 = vunpack.c.l.b16 %v255
    %v497 = vunpack.c.l.b16 %v256
    %v498 = vunpack.c.h.b16 %v256
    %v499 = vunpack.c.l.b16 %v257
    %v500 = vunpack.c.l.b16 %v258
    %v501 = vunpack.c.h.b16 %v258
    %v502 = vunpack.c.l.b16 %v259
    %v503 = vunpack.c.l.b16 %v260
    %v504 = vunpack.c.h.b16 %v260
    %v505 = vunpack.c.l.b16 %v261
    %v506 = vunpack.c.l.b16 %v262
    %v507 = vunpack.c.h.b16 %v262
    %v508 = vunpack.c.l.b16 %v263
    %v509 = vunpack.c.l.b16 %v264
    %v510 = vunpack.c.h.b16 %v264
    %v511 = vunpack.c.l.b16 %v265
    %v512 = vunpack.c.l.b16 %v266
    %v513 = vunpack.c.h.b16 %v266
    %v514 = vunpack.c.l.b16 %v267
    %v515 = vunpack.c.l.b16 %v268
    %v516 = vunpack.c.h.b16 %v268
    %v517 = vunpack.c.l.b16 %v269
    %v518 = vunpack.c.l.b16 %v270
    %v519 = vunpack.c.h.b16 %v270
    %v520 = vunpack.c.l.b16 %v271
    %v521 = vunpack.c.l.b16 %v272
    %v522 = vunpack.c.h.b16 %v272
    %v523 = vunpack.c.l.b16 %v273
    %v524 = vunpack.c.l.b16 %v274
    %v525 = vunpack.c.h.b16 %v274
    %v526 = vunpack.c.l.b16 %v275
    %v527 = vunpack.c.l.b16 %v276
    %v528 = vunpack.c.h.b16 %v276
    %v529 = vunpack.c.l.b16 %v277
    %v530 = vunpack.c.l.b16 %v278
    %v531 = vunpack.c.h.b16 %v278
    %v532 = vunpack.c.l.b16 %v279
    %v533 = vunpack.c.l.b16 %v280
    %v534 = vunpack.c.h.b16 %v280
    %v535 = vunpack.c.l.b16 %v281
    %v536 = vunpack.c.l.b16 %v282
    %v537 = vunpack.c.h.b16 %v282
    %v538 = vunpack.c.l.b16 %v283
    %v539 = vunpack.c.l.b16 %v284
    %v540 = vunpack.c.h.b16 %v284
    %v541 = vunpack.c.l.b16 %v285
    %v542 = vunpack.c.l.b16 %v286
    %v543 = vunpack.c.h.b16 %v286
    %v544 = vunpack.c.l.b16 %v287
    %v545 = vunpack.c.l.b16 %v288
    %v546 = vunpack.c.h.b16 %v288
    %v547 = vunpack.c.l.b16 %v289
    %v548 = vunpack.c.l.b16 %v290
    %v549 = vunpack.c.h.b16 %v290
    %v550 = vunpack.c.l.b16 %v291
    %v551 = vunpack.c.l.b16 %v292
    %v552 = vunpack.c.h.b16 %v292
    %v553 = vunpack.c.l.b16 %v293
    %v554 = vunpack.c.l.b16 %v294
    %v555 = vunpack.c.h.b16 %v294
    %v556 = vunpack.c.l.b16 %v295
    %v557 = vunpack.c.l.b16 %v296
    %v558 = vunpack.c.h.b16 %v296
    %v559 = vunpack.c.l.b16 %v297
    %v560 = vunpack.c.l.b16 %v298
    %v561 = vunpack.c.h.b16 %v298
    %v562 = vunpack.c.l.b16 %v299
    %v563 = vunpack.c.l.b16 %v300
    %v564 = vunpack.c.h.b16 %v300
    %v565 = vunpack.c.l.b16 %v301
    %v566 = vunpack.c.l.b16 %v302
    %v567 = vunpack.c.h.b16 %v302
    %v568 = vunpack.c.l.b16 %v303
    %v569 = vunpack.c.l.b16 %v304
    %v570 = vunpack.c.h.b16 %v304
    %v571 = vunpack.c.l.b16 %v305
    %v572 = vunpack.c.l.b16 %v306
    %v573 = vunpack.c.h.b16 %v306
    %v574 = vunpack.c.l.b16 %v307
    %v575 = vpack.c.b16 %v428, %v425
    %v576 = vpack.c.b16 %v429, %v426
    %v577 = vpack.c.b16 %v430, %v427
    %v578 = vpack.c.b16 %v434, %v431
    %v579 = vpack.c.b16 %v435, %v432
    %v580 = vpack.c.b16 %v436, %v433
    %v581 = vpack.c.b16 %v440, %v437
    %v582 = vpack.c.b16 %v441, %v438
    %v583 = vpack.c.b16 %v442, %v439
    %v584 = vpack.c.b16 %v446, %v443
    %v585 = vpack.c.b16 %v447, %v444
    %v586 = vpack.c.b16 %v448, %v445
    %v587 = vpack.c.b16 %v452, %v449
    %v588 = vpack.c.b16 %v453, %v450
    %v589 = vpack.c.b16 %v454, %v451
    %v590 = vpack.c.b16 %v458, %v455
    %v591 = vpack.c.b16 %v459, %v456
    %v592 = vpack.c.b16 %v460, %v457
    %v593 = vpack.c.b16 %v464, %v461
    %v594 = vpack.c.b16 %v465, %v462
    %v595 = vpack.c.b16 %v466, %v463
    %v596 = vpack.c.b16 %v470, %v467
    %v597 = vpack.c.b16 %v471, %v468
    %v598 = vpack.c.b16 %v472, %v469
    %v599 = vpack.c.b16 %v476, %v473
    %v600 = vpack.c.b16 %v477, %v474
    %v601 = vpack.c.b16 %v478, %v475
    %v602 = vpack.c.b16 %v482, %v479
    %v603 = vpack.c.b16 %v483, %v480
    %v604 = vpack.c.b16 %v484, %v481
    %v605 = vpack.c.b16 %v488, %v485
    %v606 = vpack.c.b16 %v489, %v486
    %v607 = vpack.c.b16 %v490, %v487
    %v608 = vpack.c.b16 %v494, %v491
    %v609 = vpack.c.b16 %v495, %v492
    %v610 = vpack.c.b16 %v496, %v493
    %v611 = vpack.c.b16 %v500, %v497
    %v612 = vpack.c.b16 %v501, %v498
    %v613 = vpack.c.b16 %v502, %v499
    %v614 = vpack.c.b16 %v506, %v503
    %v615 = vpack.c.b16 %v507, %v504
    %v616 = vpack.c.b16 %v508, %v505
    %v617 = vpack.c.b16 %v512, %v509
    %v618 = vpack.c.b16 %v513, %v510
    %v619 = vpack.c.b16 %v514, %v511
    %v620 = vpack.c.b16 %v518, %v515
    %v621 = vpack.c.b16 %v519, %v516
    %v622 = vpack.c.b16 %v520, %v517
    %v623 = vpack.c.b16 %v524, %v521
    %v624 = vpack.c.b16 %v525, %v522
    %v625 = vpack.c.b16 %v526, %v523
    %v626 = vpack.c.b16 %v530, %v527
    %v627 = vpack.c.b16 %v531, %v528
    %v628 = vpack.c.b16 %v532, %v529
    %v629 = vpack.c.b16 %v536, %v533
    %v630 = vpack.c.b16 %v537, %v534
    %v631 = vpack.c.b16 %v538, %v535
    %v632 = vpack.c.b16 %v542, %v539
    %v633 = vpack.c.b16 %v543, %v540
    %v634 = vpack.c.b16 %v544, %v541
    %v635 = vpack.c.b16 %v548, %v545
    %v636 = vpack.c.b16 %v549, %v546
    %v637 = vpack.c.b16 %v550, %v547
    %v638 = vpack.c.b16 %v554, %v551
    %v639 = vpack.c.b16 %v555, %v552
    %v640 = vpack.c.b16 %v556, %v553
    %v641 = vpack.c.b16 %v560, %v557
    %v642 = vpack.c.b16 %v561, %v558
    %v643 = vpack.c.b16 %v562, %v559
    %v644 = vpack.c.b16 %v566, %v563
    %v645 = vpack.c.b16 %v567, %v564
    %v646 = vpack.c.b16 %v568, %v565
    %v647 = vpack.c.b16 %v572, %v569
    %v648 = vpack.c.b16 %v573, %v570
    %v649 = vpack.c.b16 %v574, %v571
    %vm725 = vcmask 130048
    %v727 = vsel %vm725, %v207, 0
    %729 = vmatprep.subr.bf16.mxu0 %v597
    %730 = vmatpush1.bf16.msra.mxu0 %v596
    %731 = vmatprep.subr.bf16.mxu0 %v594
    %732 = vmatpush1.bf16.msra.mxu0 %v593
    %733 = vmatprep.subr.bf16.mxu0 %v591
    %734 = vmatpush1.bf16.msra.mxu0 %v590
    %735 = vmatprep.subr.bf16.mxu0 %v588
    %736 = vmatpush1.bf16.msra.mxu0 %v587
    %737 = vmatprep.subr.bf16.mxu0 %v585
    %738 = vmatpush1.bf16.msra.mxu0 %v584
    %739 = vmatprep.subr.bf16.mxu0 %v582
    %740 = vmatpush1.bf16.msra.mxu0 %v581
    %741 = vmatprep.subr.bf16.mxu0 %v579
    %742 = vmatpush1.bf16.msra.mxu0 %v578
    %743 = vmatprep.subr.bf16.mxu0 %v576
    %744 = vmatpush1.bf16.msra.mxu0 %v575
    %745 = vmatprep.subr.bf16.mxu0 %v621
    %746 = vmatpush2.bf16.msra.mxu0 %v620
    %747 = vmatprep.subr.bf16.mxu0 %v618
    %748 = vmatpush2.bf16.msra.mxu0 %v617
    %749 = vmatprep.subr.bf16.mxu0 %v615
    %750 = vmatpush2.bf16.msra.mxu0 %v614
    %751 = vmatprep.subr.bf16.mxu0 %v612
    %752 = vmatpush2.bf16.msra.mxu0 %v611
    %753 = vmatprep.subr.bf16.mxu0 %v609
    %754 = vmatpush2.bf16.msra.mxu0 %v608
    %755 = vmatprep.subr.bf16.mxu0 %v606
    %756 = vmatpush2.bf16.msra.mxu0 %v605
    %757 = vmatprep.subr.bf16.mxu0 %v603
    %758 = vmatpush2.bf16.msra.mxu0 %v602
    %759 = vmatprep.subr.bf16.mxu0 %v600
    %760 = vmatpush2.bf16.msra.mxu0 %v599
    %761 = vmatprep.mubr.bf16.mxu0 %v205
    %762 = vmatmul.mubr.bf16.gmra.mxu0 %v204
    %v763 = vpop.f32.mrf.mxu0
    %v764 = vadd.f32 %v313, %v763
    %v765 = vpop.f32.mrf.mxu0
    %v766 = vadd.f32 %v317, %v765
    %v767 = vpop.f32.mrf.mxu0
    %v768 = vpop.f32.mrf.mxu0
    %769 = vdwg.mxu0
    %770 = vmatprep.subr.bf16.mxu0 %v645
    %771 = vmatpush1.bf16.msra.mxu0 %v644
    %772 = vmatprep.subr.bf16.mxu0 %v642
    %773 = vmatpush1.bf16.msra.mxu0 %v641
    %774 = vmatprep.subr.bf16.mxu0 %v639
    %775 = vmatpush1.bf16.msra.mxu0 %v638
    %776 = vmatprep.subr.bf16.mxu0 %v636
    %777 = vmatpush1.bf16.msra.mxu0 %v635
    %778 = vmatprep.subr.bf16.mxu0 %v633
    %779 = vmatpush1.bf16.msra.mxu0 %v632
    %780 = vmatprep.subr.bf16.mxu0 %v630
    %781 = vmatpush1.bf16.msra.mxu0 %v629
    %782 = vmatprep.subr.bf16.mxu0 %v627
    %783 = vmatpush1.bf16.msra.mxu0 %v626
    %784 = vmatprep.subr.bf16.mxu0 %v624
    %785 = vmatpush1.bf16.msra.mxu0 %v623
    %786 = vmatprep.subr.bf16.mxu0 0
    %787 = vmatpush2.bf16.msra.mxu0 0
    %788 = vmatprep.subr.bf16.mxu0 0
    %789 = vmatpush2.bf16.msra.mxu0 0
    %790 = vmatprep.subr.bf16.mxu0 0
    %791 = vmatpush2.bf16.msra.mxu0 0
    %792 = vmatprep.subr.bf16.mxu0 0
    %793 = vmatpush2.bf16.msra.mxu0 0
    %794 = vmatprep.subr.bf16.mxu0 0
    %795 = vmatpush2.bf16.msra.mxu0 0
    %796 = vmatprep.subr.bf16.mxu0 0
    %797 = vmatpush2.bf16.msra.mxu0 0
    %798 = vmatprep.subr.bf16.mxu0 0
    %799 = vmatpush2.bf16.msra.mxu0 0
    %800 = vmatprep.subr.bf16.mxu0 %v648
    %801 = vmatpush2.bf16.msra.mxu0 %v647
    %802 = vmatprep.mubr.bf16.mxu0 %v727
    %803 = vmatmul.mubr.bf16.gmra.mxu0 %v206
    %v804 = vpop.f32.mrf.mxu0
    %v805 = vadd.f32 %v764, %v804
    %v806 = vpop.f32.mrf.mxu0
    %v807 = vadd.f32 %v766, %v806
    %v808 = vpop.f32.mrf.mxu0
    %v809 = vpop.f32.mrf.mxu0
    %810 = vdwg.mxu0
    %811 = vmatprep.subr.bf16.mxu0 0
    %812 = vmatpush1.bf16.msra.mxu0 %v598
    %813 = vmatprep.subr.bf16.mxu0 0
    %814 = vmatpush1.bf16.msra.mxu0 %v595
    %815 = vmatprep.subr.bf16.mxu0 0
    %816 = vmatpush1.bf16.msra.mxu0 %v592
    %817 = vmatprep.subr.bf16.mxu0 0
    %818 = vmatpush1.bf16.msra.mxu0 %v589
    %819 = vmatprep.subr.bf16.mxu0 0
    %820 = vmatpush1.bf16.msra.mxu0 %v586
    %821 = vmatprep.subr.bf16.mxu0 0
    %822 = vmatpush1.bf16.msra.mxu0 %v583
    %823 = vmatprep.subr.bf16.mxu0 0
    %824 = vmatpush1.bf16.msra.mxu0 %v580
    %825 = vmatprep.subr.bf16.mxu0 0
    %826 = vmatpush1.bf16.msra.mxu0 %v577
    %827 = vmatprep.subr.bf16.mxu0 0
    %828 = vmatpush2.bf16.msra.mxu0 %v622
    %829 = vmatprep.subr.bf16.mxu0 0
    %830 = vmatpush2.bf16.msra.mxu0 %v619
    %831 = vmatprep.subr.bf16.mxu0 0
    %832 = vmatpush2.bf16.msra.mxu0 %v616
    %833 = vmatprep.subr.bf16.mxu0 0
    %834 = vmatpush2.bf16.msra.mxu0 %v613
    %835 = vmatprep.subr.bf16.mxu0 0
    %836 = vmatpush2.bf16.msra.mxu0 %v610
    %837 = vmatprep.subr.bf16.mxu0 0
    %838 = vmatpush2.bf16.msra.mxu0 %v607
    %839 = vmatprep.subr.bf16.mxu0 0
    %840 = vmatpush2.bf16.msra.mxu0 %v604
    %841 = vmatprep.subr.bf16.mxu0 0
    %842 = vmatpush2.bf16.msra.mxu0 %v601
    %843 = vmatprep.mubr.bf16.mxu0 %v205
    %844 = vmatmul.mubr.bf16.gmra.mxu0 %v204
    %v845 = vpop.f32.mrf.mxu0
    %v846 = vadd.f32 %v321, %v845
    %v847 = vpop.f32.mrf.mxu0
    %v848 = vpop.f32.mrf.mxu0
    %v849 = vpop.f32.mrf.mxu0
    %850 = vdwg.mxu0
    %851 = vmatprep.subr.bf16.mxu0 0
    %852 = vmatpush1.bf16.msra.mxu0 %v646
    %853 = vmatprep.subr.bf16.mxu0 0
    %854 = vmatpush1.bf16.msra.mxu0 %v643
    %855 = vmatprep.subr.bf16.mxu0 0
    %856 = vmatpush1.bf16.msra.mxu0 %v640
    %857 = vmatprep.subr.bf16.mxu0 0
    %858 = vmatpush1.bf16.msra.mxu0 %v637
    %859 = vmatprep.subr.bf16.mxu0 0
    %860 = vmatpush1.bf16.msra.mxu0 %v634
    %861 = vmatprep.subr.bf16.mxu0 0
    %862 = vmatpush1.bf16.msra.mxu0 %v631
    %863 = vmatprep.subr.bf16.mxu0 0
    %864 = vmatpush1.bf16.msra.mxu0 %v628
    %865 = vmatprep.subr.bf16.mxu0 0
    %866 = vmatpush1.bf16.msra.mxu0 %v625
    %867 = vmatprep.subr.bf16.mxu0 0
    %868 = vmatpush2.bf16.msra.mxu0 0
    %869 = vmatprep.subr.bf16.mxu0 0
    %870 = vmatpush2.bf16.msra.mxu0 0
    %871 = vmatprep.subr.bf16.mxu0 0
    %872 = vmatpush2.bf16.msra.mxu0 0
    %873 = vmatprep.subr.bf16.mxu0 0
    %874 = vmatpush2.bf16.msra.mxu0 0
    %875 = vmatprep.subr.bf16.mxu0 0
    %876 = vmatpush2.bf16.msra.mxu0 0
    %877 = vmatprep.subr.bf16.mxu0 0
    %878 = vmatpush2.bf16.msra.mxu0 0
    %879 = vmatprep.subr.bf16.mxu0 0
    %880 = vmatpush2.bf16.msra.mxu0 0
    %881 = vmatprep.subr.bf16.mxu0 0
    %882 = vmatpush2.bf16.msra.mxu0 %v649
    %883 = vmatprep.mubr.bf16.mxu0 %v727
    %884 = vmatmul.mubr.bf16.gmra.mxu0 %v206
    %v885 = vpop.f32.mrf.mxu0
    %v886 = vadd.f32 %v846, %v885
    %v887 = vpop.f32.mrf.mxu0
    %v888 = vpop.f32.mrf.mxu0
    %v889 = vpop.f32.mrf.mxu0
    %890 = vdwg.mxu0
    %v891 = vpack.c.bf16 %v805, %v805
    %v892 = vpack.c.bf16 %v807, %v807
    %v893 = vpack.c.bf16 %v886, %v886
    %v894 = vmax.bf16 %v891, 0
    %v895 = vmax.bf16 %v892, 0
    %v896 = vmax.bf16 %v893, 0
    %v897 = vld [vmem:[%s5] sm:$0xf]
    %v898 = vld [vmem:[%s5 + $0x4] sm:$0xf]
    %v899 = vld [vmem:[%s5 + $0x8] sm:$0xf]
    %v900 = vld [vmem:[%s5 + $0xc] sm:$0xf]
    %v901 = vld [vmem:[%s5 + $0x10] sm:$0xf]
    %v902 = vld [vmem:[%s5 + $0x14] sm:$0xf]
    %v903 = vld [vmem:[%s5 + $0x18] sm:$0xf]
    %v904 = vld [vmem:[%s5 + $0x1c] sm:$0xf]
    %v905 = vld [vmem:[%s5 + $0x20] sm:$0xf]
    %v906 = vld [vmem:[%s5 + $0x24] sm:$0xf]
    %v907 = vld [vmem:[%s5 + $0x28] sm:$0xf]
    %v908 = vld [vmem:[%s5 + $0x2c] sm:$0xf]
    %v909 = vld [vmem:[%s5 + $0x30] sm:$0xf]
    %v910 = vld [vmem:[%s5 + $0x34] sm:$0xf]
    %v911 = vld [vmem:[%s5 + $0x38] sm:$0xf]
    %v912 = vld [vmem:[%s5 + $0x3c] sm:$0xf]
    %v913 = vld [vmem:[%s5 + $0x40] sm:$0xf]
    %v914 = vld [vmem:[%s5 + $0x44] sm:$0xf]
    %v915 = vld [vmem:[%s5 + $0x48] sm:$0xf]
    %v916 = vld [vmem:[%s5 + $0x4c] sm:$0xf]
    %v917 = vld [vmem:[%s5 + $0x50] sm:$0xf]
    %v918 = vld [vmem:[%s5 + $0x54] sm:$0xf]
    %v919 = vld [vmem:[%s5 + $0x58] sm:$0xf]
    %v920 = vld [vmem:[%s5 + $0x5c] sm:$0xf]
    %v921 = vld [vmem:[%s5 + $0x60] sm:$0xf]
    %v922 = vld [vmem:[%s5 + $0x64] sm:$0xf]
    %v923 = vld [vmem:[%s5 + $0x68] sm:$0xf]
    %v924 = vld [vmem:[%s5 + $0x6c] sm:$0xf]
    %v925 = vld [vmem:[%s5 + $0x70] sm:$0xf]
    %v926 = vld [vmem:[%s5 + $0x74] sm:$0xf]
    %v927 = vld [vmem:[%s5 + $0x78] sm:$0xf]
    %v928 = vld [vmem:[%s5 + $0x7c] sm:$0xf]
    %v929 = vld [vmem:[%s5 + $0x80] sm:$0xf]
    %v930 = vld [vmem:[%s5 + $0x84] sm:$0xf]
    %v931 = vld [vmem:[%s5 + $0x88] sm:$0xf]
    %v932 = vld [vmem:[%s5 + $0x8c] sm:$0xf]
    %v933 = vld [vmem:[%s5 + $0x90] sm:$0xf]
    %v934 = vld [vmem:[%s5 + $0x94] sm:$0xf]
    %v935 = vld [vmem:[%s5 + $0x98] sm:$0xf]
    %v936 = vld [vmem:[%s5 + $0x9c] sm:$0xf]
    %v937 = vld [vmem:[%s5 + $0xa0] sm:$0xf]
    %v938 = vld [vmem:[%s5 + $0xa4] sm:$0xf]
    %v939 = vld [vmem:[%s5 + $0xa8] sm:$0xf]
    %v940 = vld [vmem:[%s5 + $0xac] sm:$0xf]
    %v941 = vld [vmem:[%s5 + $0xb0] sm:$0xf]
    %v942 = vld [vmem:[%s5 + $0xb4] sm:$0xf]
    %v943 = vld [vmem:[%s5 + $0xb8] sm:$0xf]
    %v944 = vld [vmem:[%s5 + $0xbc] sm:$0xf]
    %v945 = vld [vmem:[%s6] sm:$0x1]
    %v947 = vlaneseq
    %v948 = vshrl.u32 %v947, 7
    %v949 = vsub.s32 0, %v948
    %v950 = vrot.slane %v945, %v949
    %v1000 = vunpack.c.l.b16 %v897
    %v1001 = vunpack.c.l.b16 %v898
    %v1002 = vunpack.c.l.b16 %v899
    %v1003 = vunpack.c.l.b16 %v900
    %v1004 = vunpack.c.l.b16 %v901
    %v1005 = vunpack.c.l.b16 %v902
    %v1006 = vunpack.c.l.b16 %v903
    %v1007 = vunpack.c.l.b16 %v904
    %v1008 = vunpack.c.l.b16 %v905
    %v1009 = vunpack.c.l.b16 %v906
    %v1010 = vunpack.c.l.b16 %v907
    %v1011 = vunpack.c.l.b16 %v908
    %v1012 = vunpack.c.l.b16 %v909
    %v1013 = vunpack.c.l.b16 %v910
    %v1014 = vunpack.c.l.b16 %v911
    %v1015 = vunpack.c.l.b16 %v912
    %v1016 = vunpack.c.l.b16 %v913
    %v1017 = vunpack.c.l.b16 %v914
    %v1018 = vunpack.c.l.b16 %v915
    %v1019 = vunpack.c.l.b16 %v916
    %v1020 = vunpack.c.l.b16 %v917
    %v1021 = vunpack.c.l.b16 %v918
    %v1022 = vunpack.c.l.b16 %v919
    %v1023 = vunpack.c.l.b16 %v920
    %v1024 = vunpack.c.l.b16 %v921
    %v1025 = vunpack.c.l.b16 %v922
    %v1026 = vunpack.c.l.b16 %v923
    %v1027 = vunpack.c.l.b16 %v924
    %v1028 = vunpack.c.l.b16 %v925
    %v1029 = vunpack.c.l.b16 %v926
    %v1030 = vunpack.c.l.b16 %v927
    %v1031 = vunpack.c.l.b16 %v928
    %v1032 = vunpack.c.l.b16 %v929
    %v1033 = vunpack.c.l.b16 %v930
    %v1034 = vunpack.c.l.b16 %v931
    %v1035 = vunpack.c.l.b16 %v932
    %v1036 = vunpack.c.l.b16 %v933
    %v1037 = vunpack.c.l.b16 %v934
    %v1038 = vunpack.c.l.b16 %v935
    %v1039 = vunpack.c.l.b16 %v936
    %v1040 = vunpack.c.l.b16 %v937
    %v1041 = vunpack.c.l.b16 %v938
    %v1042 = vunpack.c.l.b16 %v939
    %v1043 = vunpack.c.l.b16 %v940
    %v1044 = vunpack.c.l.b16 %v941
    %v1045 = vunpack.c.l.b16 %v942
    %v1046 = vunpack.c.l.b16 %v943
    %v1047 = vunpack.c.l.b16 %v944
    %v1048 = vpack.c.b16 %v1001, %v1000
    %v1049 = vpack.c.b16 %v1003, %v1002
    %v1050 = vpack.c.b16 %v1005, %v1004
    %v1051 = vpack.c.b16 %v1007, %v1006
    %v1052 = vpack.c.b16 %v1009, %v1008
    %v1053 = vpack.c.b16 %v1011, %v1010
    %v1054 = vpack.c.b16 %v1013, %v1012
    %v1055 = vpack.c.b16 %v1015, %v1014
    %v1056 = vpack.c.b16 %v1017, %v1016
    %v1057 = vpack.c.b16 %v1019, %v1018
    %v1058 = vpack.c.b16 %v1021, %v1020
    %v1059 = vpack.c.b16 %v1023, %v1022
    %v1060 = vpack.c.b16 %v1025, %v1024
    %v1061 = vpack.c.b16 %v1027, %v1026
    %v1062 = vpack.c.b16 %v1029, %v1028
    %v1063 = vpack.c.b16 %v1031, %v1030
    %v1064 = vpack.c.b16 %v1033, %v1032
    %v1065 = vpack.c.b16 %v1035, %v1034
    %v1066 = vpack.c.b16 %v1037, %v1036
    %v1067 = vpack.c.b16 %v1039, %v1038
    %v1068 = vpack.c.b16 %v1041, %v1040
    %v1069 = vpack.c.b16 %v1043, %v1042
    %v1070 = vpack.c.b16 %v1045, %v1044
    %v1071 = vpack.c.b16 %v1047, %v1046
    %1096 = vmatprep.subr.bf16.mxu0 0
    %1097 = vmatpush1.bf16.msra.mxu0 %v1055
    %1098 = vmatprep.subr.bf16.mxu0 0
    %1099 = vmatpush1.bf16.msra.mxu0 %v1054
    %1100 = vmatprep.subr.bf16.mxu0 0
    %1101 = vmatpush1.bf16.msra.mxu0 %v1053
    %1102 = vmatprep.subr.bf16.mxu0 0
    %1103 = vmatpush1.bf16.msra.mxu0 %v1052
    %1104 = vmatprep.subr.bf16.mxu0 0
    %1105 = vmatpush1.bf16.msra.mxu0 %v1051
    %1106 = vmatprep.subr.bf16.mxu0 0
    %1107 = vmatpush1.bf16.msra.mxu0 %v1050
    %1108 = vmatprep.subr.bf16.mxu0 0
    %1109 = vmatpush1.bf16.msra.mxu0 %v1049
    %1110 = vmatprep.subr.bf16.mxu0 0
    %1111 = vmatpush1.bf16.msra.mxu0 %v1048
    %1112 = vmatprep.subr.bf16.mxu0 0
    %1113 = vmatpush2.bf16.msra.mxu0 %v1063
    %1114 = vmatprep.subr.bf16.mxu0 0
    %1115 = vmatpush2.bf16.msra.mxu0 %v1062
    %1116 = vmatprep.subr.bf16.mxu0 0
    %1117 = vmatpush2.bf16.msra.mxu0 %v1061
    %1118 = vmatprep.subr.bf16.mxu0 0
    %1119 = vmatpush2.bf16.msra.mxu0 %v1060
    %1120 = vmatprep.subr.bf16.mxu0 0
    %1121 = vmatpush2.bf16.msra.mxu0 %v1059
    %1122 = vmatprep.subr.bf16.mxu0 0
    %1123 = vmatpush2.bf16.msra.mxu0 %v1058
    %1124 = vmatprep.subr.bf16.mxu0 0
    %1125 = vmatpush2.bf16.msra.mxu0 %v1057
    %1126 = vmatprep.subr.bf16.mxu0 0
    %1127 = vmatpush2.bf16.msra.mxu0 %v1056
    %1128 = vmatprep.mubr.bf16.mxu0 %v895
    %1129 = vmatmul.mubr.bf16.gmra.mxu0 %v894
    %v1130 = vpop.f32.mrf.mxu0
    %v1131 = vadd.f32 %v950, %v1130
    %v1132 = vpop.f32.mrf.mxu0
    %v1133 = vpop.f32.mrf.mxu0
    %v1134 = vpop.f32.mrf.mxu0
    %1135 = vdwg.mxu0
    %1136 = vmatprep.subr.bf16.mxu0 0
    %1137 = vmatpush1.bf16.msra.mxu0 %v1071
    %1138 = vmatprep.subr.bf16.mxu0 0
    %1139 = vmatpush1.bf16.msra.mxu0 %v1070
    %1140 = vmatprep.subr.bf16.mxu0 0
    %1141 = vmatpush1.bf16.msra.mxu0 %v1069
    %1142 = vmatprep.subr.bf16.mxu0 0
    %1143 = vmatpush1.bf16.msra.mxu0 %v1068
    %1144 = vmatprep.subr.bf16.mxu0 0
    %1145 = vmatpush1.bf16.msra.mxu0 %v1067
    %1146 = vmatprep.subr.bf16.mxu0 0
    %1147 = vmatpush1.bf16.msra.mxu0 %v1066
    %1148 = vmatprep.subr.bf16.mxu0 0
    %1149 = vmatpush1.bf16.msra.mxu0 %v1065
    %1150 = vmatprep.subr.bf16.mxu0 0
    %1151 = vmatpush1.bf16.msra.mxu0 %v1064
    %1152 = vmatprep.subr.bf16.mxu0 0
    %1153 = vmatpush2.bf16.msra.mxu0 0
    %1154 = vmatprep.subr.bf16.mxu0 0
    %1155 = vmatpush2.bf16.msra.mxu0 0
    %1156 = vmatprep.subr.bf16.mxu0 0
    %1157 = vmatpush2.bf16.msra.mxu0 0
    %1158 = vmatprep.subr.bf16.mxu0 0
    %1159 = vmatpush2.bf16.msra.mxu0 0
    %1160 = vmatprep.subr.bf16.mxu0 0
    %1161 = vmatpush2.bf16.msra.mxu0 0
    %1162 = vmatprep.subr.bf16.mxu0 0
    %1163 = vmatpush2.bf16.msra.mxu0 0
    %1164 = vmatprep.subr.bf16.mxu0 0
    %1165 = vmatpush2.bf16.msra.mxu0 0
    %1166 = vmatprep.subr.bf16.mxu0 0
    %1167 = vmatpush2.bf16.msra.mxu0 0
    %1168 = vmatprep.mubr.bf16.mxu0 0
    %1169 = vmatmul.mubr.bf16.gmra.mxu0 %v896
    %v1170 = vpop.f32.mrf.mxu0
    %v1171 = vadd.f32 %v1131, %v1170
    %v1172 = vpop.f32.mrf.mxu0
    %v1173 = vpop.f32.mrf.mxu0
    %v1174 = vpop.f32.mrf.mxu0
    %1175 = vdwg.mxu0
    %v1176 = vtanh.pop %v1171
    %vm1177 = vcmask 25600
    %1178 = vst.msk [vmem:[#allocation5] sm:$0x3] %vm1177, %v1176
    // Predicated region
    $region34: #{actor_forward.1} parent=1 // pred_check
      _
    $region35: #{actor_forward.1} parent=1 // pred_check_branch
      %1180 = sbr.rel (0) target = $region37
    $region36: #{actor_forward.1} parent=1 // pred_region
      %s1182 = ssub.s32 32, 32
      %1183 = vsyncadd [#allocation4], %s1182
      %s1185 = sshll.u32 [#allocation5], 4
      %s1186 = int_to_ptr.vmem [resolvable:$true] %s1185
      %1188 = dma.vmem_to_hbm [thread:$0]  %s1186, 32, %s7, [#allocation4]
    $region37: #{actor_forward.1} parent=1 // pred_fallthru
      _
    // Predicated region
    $region38: #{actor_forward.1} parent=1 // pred_check
      _
    $region39: #{actor_forward.1} parent=1 // pred_check_branch
      %1190 = sbr.rel (0) target = $region41
    $region40: #{actor_forward.1} parent=1 // pred_region
      %1191 = dma.done [#allocation4], 32
    $region41: #{actor_forward.1} parent=1 // pred_fallthru
      _
    %1192 = vsyncpa [#allocation3], 1
    %1193 = vsyncpa [#allocation4], 1

</llo_original>
